<compile_context>
chip_gen: v7x
topology: tpu7x:2x2x1
jax: 0.10.0
libtpu: 0.0.40
codegen_flags: <defaults>
</compile_context>

<pallas_src>
import functools

import jax
import jax.numpy as jnp
from jax.experimental import pallas as pl
from jax.experimental.pallas import tpu as pltpu


def _round_up(n, m):
    return ((n + m - 1) // m) * m


def _fused_proto_kernel(x_ref, wt_ref, o_ref):
    # One MXU matmul per (B-tile, K-tile): bf16 inputs, f32 accumulate.
    o_ref[...] = jnp.dot(
        x_ref[...], wt_ref[...], preferred_element_type=jnp.float32
    ).astype(o_ref.dtype)


@functools.partial(jax.jit, static_argnames=("tb", "tk"))
def _fused_heads(x, w_cat_t, *, tb, tk):
    """x: (Bp, D) bf16 (Bp % tb == 0), w_cat_t: (D, Kp) bf16 (Kp % tk == 0) -> (Bp, Kp) f32."""
    B, D = x.shape
    Dw, Kp = w_cat_t.shape
    assert D == Dw and Kp % tk == 0 and B % tb == 0
    n_b = B // tb
    n_k = Kp // tk

    cost = pl.CostEstimate(
        flops=2 * B * D * Kp,
        transcendentals=0,
        bytes_accessed=(B * D * 2) + (D * Kp * 2) + (B * Kp * 4),
    )

    return pl.pallas_call(
        _fused_proto_kernel,
        out_shape=jax.ShapeDtypeStruct((B, Kp), jnp.float32),
        grid_spec=pl.GridSpec(
            # K outer / B inner: the weight tile's block index only changes
            # with the outer axis, so Pallas keeps it resident (no re-DMA)
            # across all inner B tiles -> weight read from HBM once per K
            # tile ("weight-stationary"); the small x tiles stream instead.
            grid=(n_k, n_b),
            in_specs=[
                # x: (tB, D) tile, re-used across K tiles of the same B tile.
                pl.BlockSpec((tb, D), lambda j, i: (i, 0)),
                # weight: (D, tK) lane-dense tile, stationary over inner axis.
                pl.BlockSpec((D, tk), lambda j, i: (0, j)),
            ],
            out_specs=pl.BlockSpec((tb, tk), lambda j, i: (i, j)),
        ),
        compiler_params=pltpu.CompilerParams(
            # Both axes are fully independent -> shard across both
            # TensorCores on v7x (no effect on single-TC v5e/v6e).
            dimension_semantics=("parallel", "parallel"),
            # Explicit budget: fits v7x's 64 MiB physical VMEM with headroom
            # and raises v5e's 16 MiB scoped default.
            vmem_limit_bytes=32 * 1024 * 1024,
        ),
        cost_estimate=cost,
    )(x, w_cat_t)


class MultiPrototypes:
    """JAX/Pallas port of the PyTorch MultiPrototypes module (fused bf16 heads)."""

    _TK = 512          # K tile: lane-dense, fills the 256-wide MXU on v6e/v7x
    _HEAD_ALIGN = 128  # per-head padding so per-head slice offsets are lane-aligned

    def __init__(self, output_dim, nmb_prototypes, key):
        self.nmb_heads = len(nmb_prototypes)
        self.nmb_prototypes = list(nmb_prototypes)
        self.output_dim = output_dim

        # Per-head PyTorch-style weights (k_i, D), kept in f32 for reference.
        keys = jax.random.split(key, self.nmb_heads)
        bound = 1.0 / float(output_dim) ** 0.5
        self.weights = []
        for k_i, sub in zip(nmb_prototypes, keys):
            w = jax.random.uniform(
                sub, (k_i, output_dim), dtype=jnp.float32,
                minval=-bound, maxval=bound,
            )
            self.weights.append(w)

        # Build the fused weight ONCE: transpose, cast to bf16, pad every head
        # to a multiple of 128 columns (lane-aligned offsets), concatenate,
        # then pad the total up to a multiple of the K tile.
        cols, offsets, off = [], [], 0
        for w, k_i in zip(self.weights, self.nmb_prototypes):
            wt = w.T.astype(jnp.bfloat16)                  # (D, k_i)
            k_pad_i = _round_up(k_i, self._HEAD_ALIGN)
            if k_pad_i != k_i:
                wt = jnp.pad(wt, ((0, 0), (0, k_pad_i - k_i)))
            cols.append(wt)
            offsets.append(off)
            off += k_pad_i
        w_cat_t = jnp.concatenate(cols, axis=1)            # (D, sum k_pad_i)
        k_heads = w_cat_t.shape[1]
        k_pad = _round_up(max(k_heads, self._TK), self._TK)
        if k_pad != k_heads:
            w_cat_t = jnp.pad(w_cat_t, ((0, 0), (0, k_pad - k_heads)))
        self.w_cat_t = w_cat_t                             # (D, K_pad) bf16
        self.k_pad = k_pad
        self._offsets = offsets                            # all multiples of 128

    @staticmethod
    def _choose_tb(batch):
        # Fill the MXU M dimension at realistic batch; tiny single tile otherwise.
        if batch >= 512:
            return 256
        if batch >= 128:
            return 128
        return _round_up(batch, 8)

    def __call__(self, x):
        B, _ = x.shape
        tb = self._choose_tb(B)
        b_pad = _round_up(B, tb)
        xb = x.astype(jnp.bfloat16)
        if b_pad != B:
            xb = jnp.pad(xb, ((0, b_pad - B), (0, 0)))
        out_full = _fused_heads(xb, self.w_cat_t, tb=tb, tk=self._TK)  # (Bp, K_pad) f32
        # Per-head slices: start offsets are 128-aligned; zero padding dropped.
        # TODO(synk): for very large B*K, emit one lane-aligned out_spec per head
        # inside the kernel to avoid even this slicing pass over the output.
        return [
            out_full[:B, off:off + k_i]
            for off, k_i in zip(self._offsets, self.nmb_prototypes)
        ]


if __name__ == "__main__":
    key = jax.random.PRNGKey(0)
    k_in, k_mod = jax.random.split(key)

    batch = 8
    output_dim = 32
    nmb_prototypes = [16, 24, 48]

    x = jax.random.normal(k_in, (batch, output_dim), dtype=jnp.float32)

    model = MultiPrototypes(output_dim, nmb_prototypes, k_mod)
    outs = model(x)
    outs = [jax.block_until_ready(o) for o in outs]

    # Reference 1: same bf16 precision path as the kernel (tight tolerance).
    xb32 = x.astype(jnp.bfloat16).astype(jnp.float32)
    # Reference 2: the original f32 module semantics (bf16-rounding tolerance).
    for o, w, k_i in zip(outs, model.weights, nmb_prototypes):
        assert o.shape == (batch, k_i), (o.shape, (batch, k_i))
        wb32 = w.astype(jnp.bfloat16).astype(jnp.float32)
        ref_bf = xb32 @ wb32.T
        assert jnp.allclose(o, ref_bf, atol=5e-3, rtol=5e-3), "mismatch vs bf16 reference"
        ref_f32 = x @ w.T
        assert jnp.allclose(o, ref_f32, atol=3e-2, rtol=3e-2), "mismatch vs f32 reference"

    print("KERNEL_OK")
</pallas_src>

<mosaic_0001>
module attributes {stable_mosaic.version = 11 : i64} {
  func.func @_fused_proto_kernel(%arg0: i32, %arg1: i32, %arg2: memref<8x32xbf16, #tpu.memory_space<vmem>>, %arg3: memref<32x512xbf16, #tpu.memory_space<vmem>>, %arg4: memref<8x512xf32, #tpu.memory_space<vmem>>) attributes {dimension_semantics = [#tpu.dimension_semantics<parallel>, #tpu.dimension_semantics<parallel>], iteration_bounds = array<i64: 1, 1>, scalar_prefetch = 0 : i64, scratch_operands = 0 : i64, tpu.core_type = #tpu.core_type<tc>, window_params = [{transform_indices = @transform_0, window_bounds = array<i64: 8, 32>}, {transform_indices = @transform_1, window_bounds = array<i64: 32, 512>}, {transform_indices = @transform_2, window_bounds = array<i64: 8, 512>}]} {
    %c0 = arith.constant 0 : index
    %c0_0 = arith.constant 0 : index
    %0 = vector.load %arg2[%c0, %c0_0] : memref<8x32xbf16, #tpu.memory_space<vmem>>, vector<8x32xbf16>
    %c0_1 = arith.constant 0 : index
    %c0_2 = arith.constant 0 : index
    %1 = vector.load %arg3[%c0_1, %c0_2] : memref<32x512xbf16, #tpu.memory_space<vmem>>, vector<32x512xbf16>
    %cst = arith.constant dense<0.000000e+00> : vector<8x512xf32>
    %2 = tpu.matmul %0, %1, %cst {dimension_numbers = #tpu.dot_dimension_numbers<[1], [0], [0], [1], [0, 0, 1, 1], [], []>} : vector<8x32xbf16>, vector<32x512xbf16>, vector<8x512xf32> -> vector<8x512xf32>
    %c0_3 = arith.constant 0 : index
    %c0_4 = arith.constant 0 : index
    %3 = vector.load %arg4[%c0_3, %c0_4] : memref<8x512xf32, #tpu.memory_space<vmem>>, vector<8x512xf32>
    tpu.vector_store %arg4[%c0_3, %c0_4], %2 {strides = array<i32>} : memref<8x512xf32, #tpu.memory_space<vmem>>, vector<8x512xf32>,
    return
  }
  func.func @transform_0(%arg0: i32, %arg1: i32) -> (i32, i32) {
    %c0_i32 = arith.constant 0 : i32
    %c0_i32_0 = arith.constant 0 : i32
    return %arg1, %c0_i32 : i32, i32
  }
  func.func @transform_1(%arg0: i32, %arg1: i32) -> (i32, i32) {
    %c0_i32 = arith.constant 0 : i32
    %c0_i32_0 = arith.constant 0 : i32
    return %c0_i32, %arg0 : i32, i32
  }
  func.func @transform_2(%arg0: i32, %arg1: i32) -> (i32, i32) {
    %c0_i32 = arith.constant 0 : i32
    return %arg1, %arg0 : i32, i32
  }
}

</mosaic_0001>

<llo_original>
// kernel: _fused_heads.1
$region0: #{_fused_heads.1}
  #allocation0 [shape = 'u32[]', space=smem, size = 0x4, offset = 0x4, fixed_abs, tag = 'smem constant byte address 0x4 - core index']
  #allocation1 [shape = 'u32[144,128]{1,0:T(1,128)}', space=vmem, size = 0x12000, scoped, tag = 'internal scratch']
  %s0 = inlined_call_operand.hbm [shape: bf16[8,32], index: 0, kind: input, shape index: {}]
  %s1 = inlined_call_operand.hbm [shape: bf16[32,512], index: 1, kind: input, shape index: {}]
  %s2 = inlined_call_operand.hbm [shape: f32[8,512], index: 2, kind: output, shape index: {}]
  %s3 = sld [smem:[#allocation0]]
  $region26: #{_fused_heads.1} parent=0
    _
  %s5 = ssub.s32 1, %s3
  %s6 = scalar_select 0, %s5, %s3
  $region1: #{_fused_heads.1} parent=0
    #allocation2 [shape = 'u8[2048]{0}', space=vmem, size = 0x800, scoped, tag = 'input window, operand 0, single buffered']
    #allocation3 [shape = 's32[1]{0}', space=sflag, size = 0x4, scoped, tag = 'scoped memory for _fused_heads.1']
    #allocation4 [shape = 's32[1]{0}', space=sflag, size = 0x4, scoped, tag = 'scoped memory for _fused_heads.1']
    #allocation5 [shape = 'u8[32768]{0}', space=vmem, size = 0x8000, scoped, tag = 'input window, operand 1, single buffered']
    #allocation6 [shape = 's32[1]{0}', space=sflag, size = 0x4, scoped, tag = 'scoped memory for _fused_heads.1']
    #allocation7 [shape = 'u8[16384]{0}', space=vmem, size = 0x4000, scoped, tag = 'output window, operand 0, single buffered']
    %7 = vsyncpa [#allocation3], 0
    %8 = vsyncpa [#allocation6], 0
    %9 = vsyncpa [#allocation4], 0
    // Predicated region
    $region2: #{_fused_heads.1} parent=1 // pred_check
      _
    $region3: #{_fused_heads.1} parent=1 // pred_check_branch
      %11 = sbr.rel (0) target = $region5
    $region4: #{_fused_heads.1} parent=1 // pred_region
      %s13 = ssub.s32 64, 64
      %14 = vsyncadd [#allocation3], %s13
      %s16 = sshll.u32 [#allocation2], 4
      %s17 = int_to_ptr.vmem [resolvable:$true] %s16
      %19 = dma.hbm_to_vmem [thread:$0]  %s0, 64, %s17, [#allocation3]
    $region5: #{_fused_heads.1} parent=1 // pred_fallthru
      _
    // Predicated region
    $region6: #{_fused_heads.1} parent=1 // pred_check
      _
    $region7: #{_fused_heads.1} parent=1 // pred_check_branch
      %21 = sbr.rel (0) target = $region9
    $region8: #{_fused_heads.1} parent=1 // pred_region
      %s23 = ssub.s32 1024, 1024
      %24 = vsyncadd [#allocation6], %s23
      %s25 = sshll.u32 [#allocation5], 4
      %s26 = int_to_ptr.vmem [resolvable:$true] %s25
      %31 = dma.hbm_to_vmem [thread:$0]  %s1, 1024, %s26, [#allocation6], 256, 256, 16
    $region9: #{_fused_heads.1} parent=1 // pred_fallthru
      _
    // Predicated region
    $region10: #{_fused_heads.1} parent=1 // pred_check
      _
    $region11: #{_fused_heads.1} parent=1 // pred_check_branch
      %33 = sbr.rel (0) target = $region13
    $region12: #{_fused_heads.1} parent=1 // pred_region
      %34 = dma.done [#allocation3], 64
    $region13: #{_fused_heads.1} parent=1 // pred_fallthru
      _
    // Predicated region
    $region14: #{_fused_heads.1} parent=1 // pred_check
      _
    $region15: #{_fused_heads.1} parent=1 // pred_check_branch
      %36 = sbr.rel (0) target = $region17
    $region16: #{_fused_heads.1} parent=1 // pred_region
      %37 = dma.done [#allocation6], 1024
    $region17: #{_fused_heads.1} parent=1 // pred_fallthru
      _
    %v39 = vld [vmem:[#allocation2] sm:$0xf]
    %v40 = vld [vmem:[#allocation5] sm:$0xff]
    %v41 = vld [vmem:[#allocation5 + $0x8] sm:$0xff]
    %v42 = vld [vmem:[#allocation5 + $0x10] sm:$0xff]
    %v43 = vld [vmem:[#allocation5 + $0x18] sm:$0xff]
    %v44 = vld [vmem:[#allocation5 + $0x20] sm:$0xff]
    %v45 = vld [vmem:[#allocation5 + $0x28] sm:$0xff]
    %v46 = vld [vmem:[#allocation5 + $0x30] sm:$0xff]
    %v47 = vld [vmem:[#allocation5 + $0x38] sm:$0xff]
    %v56 = vunpack.c.l.b16 %v40
    %v57 = vunpack.c.h.b16 %v40
    %v58 = vunpack.c.l.b16 %v41
    %v59 = vunpack.c.h.b16 %v41
    %v60 = vunpack.c.l.b16 %v42
    %v61 = vunpack.c.h.b16 %v42
    %v62 = vunpack.c.l.b16 %v43
    %v63 = vunpack.c.h.b16 %v43
    %v64 = vunpack.c.l.b16 %v44
    %v65 = vunpack.c.h.b16 %v44
    %v66 = vunpack.c.l.b16 %v45
    %v67 = vunpack.c.h.b16 %v45
    %v68 = vunpack.c.l.b16 %v46
    %v69 = vunpack.c.h.b16 %v46
    %v70 = vunpack.c.l.b16 %v47
    %v71 = vunpack.c.h.b16 %v47
    %v72 = vpack.c.b16 %v60, %v56
    %v73 = vpack.c.b16 %v61, %v57
    %v74 = vpack.c.b16 %v62, %v58
    %v75 = vpack.c.b16 %v63, %v59
    %v76 = vpack.c.b16 %v68, %v64
    %v77 = vpack.c.b16 %v69, %v65
    %v78 = vpack.c.b16 %v70, %v66
    %v79 = vpack.c.b16 %v71, %v67
    %vm88 = vcmask 261120
    %v90 = vsel %vm88, %v39, 0
    %92 = vmatprep.subr.bf16.mxu0 %v73
    %93 = vmatpush1.bf16.msra.mxu0 %v72
    %94 = vmatprep.subr.bf16.mxu0 %v77
    %95 = vmatpush1.bf16.msra.mxu0 %v76
    %96 = vmatprep.subr.bf16.mxu0 0
    %97 = vmatpush1.bf16.msra.mxu0 0
    %98 = vmatprep.subr.bf16.mxu0 0
    %99 = vmatpush1.bf16.msra.mxu0 0
    %100 = vmatprep.subr.bf16.mxu0 0
    %101 = vmatpush1.bf16.msra.mxu0 0
    %102 = vmatprep.subr.bf16.mxu0 0
    %103 = vmatpush1.bf16.msra.mxu0 0
    %104 = vmatprep.subr.bf16.mxu0 0
    %105 = vmatpush1.bf16.msra.mxu0 0
    %106 = vmatprep.subr.bf16.mxu0 0
    %107 = vmatpush1.bf16.msra.mxu0 0
    %108 = vmatprep.subr.bf16.mxu0 0
    %109 = vmatpush1.bf16.msra.mxu0 0
    %110 = vmatprep.subr.bf16.mxu0 0
    %111 = vmatpush1.bf16.msra.mxu0 0
    %112 = vmatprep.subr.bf16.mxu0 0
    %113 = vmatpush1.bf16.msra.mxu0 0
    %114 = vmatprep.subr.bf16.mxu0 0
    %115 = vmatpush1.bf16.msra.mxu0 0
    %116 = vmatprep.subr.bf16.mxu0 0
    %117 = vmatpush1.bf16.msra.mxu0 0
    %118 = vmatprep.subr.bf16.mxu0 0
    %119 = vmatpush1.bf16.msra.mxu0 0
    %120 = vmatprep.subr.bf16.mxu0 0
    %121 = vmatpush1.bf16.msra.mxu0 0
    %122 = vmatprep.subr.bf16.mxu0 0
    %123 = vmatpush1.bf16.msra.mxu0 0
    %124 = vmatprep.mubr.bf16.mxu0 0
    %125 = vmatmul.mubr.bf16.gmra.mrb[0].mxu0 %v90
    %v126 = vpop.f32.mrb[0].mxu0
    %v127 = vadd.f32 0.0, %v126
    %v128 = vpop.f32.mrb[0].mxu0
    %v129 = vadd.f32 0.0, %v128
    %v130 = vpop.f32.mrb[0].mxu0
    %v131 = vpop.f32.mrb[0].mxu0
    %132 = vdwg.mxu0
    %133 = vmatprep.subr.bf16.mxu0 %v75
    %134 = vmatpush1.bf16.msra.mxu0 %v74
    %135 = vmatprep.subr.bf16.mxu0 %v79
    %136 = vmatpush1.bf16.msra.mxu0 %v78
    %137 = vmatprep.subr.bf16.mxu0 0
    %138 = vmatpush1.bf16.msra.mxu0 0
    %139 = vmatprep.subr.bf16.mxu0 0
    %140 = vmatpush1.bf16.msra.mxu0 0
    %141 = vmatprep.subr.bf16.mxu0 0
    %142 = vmatpush1.bf16.msra.mxu0 0
    %143 = vmatprep.subr.bf16.mxu0 0
    %144 = vmatpush1.bf16.msra.mxu0 0
    %145 = vmatprep.subr.bf16.mxu0 0
    %146 = vmatpush1.bf16.msra.mxu0 0
    %147 = vmatprep.subr.bf16.mxu0 0
    %148 = vmatpush1.bf16.msra.mxu0 0
    %149 = vmatprep.subr.bf16.mxu0 0
    %150 = vmatpush1.bf16.msra.mxu0 0
    %151 = vmatprep.subr.bf16.mxu0 0
    %152 = vmatpush1.bf16.msra.mxu0 0
    %153 = vmatprep.subr.bf16.mxu0 0
    %154 = vmatpush1.bf16.msra.mxu0 0
    %155 = vmatprep.subr.bf16.mxu0 0
    %156 = vmatpush1.bf16.msra.mxu0 0
    %157 = vmatprep.subr.bf16.mxu0 0
    %158 = vmatpush1.bf16.msra.mxu0 0
    %159 = vmatprep.subr.bf16.mxu0 0
    %160 = vmatpush1.bf16.msra.mxu0 0
    %161 = vmatprep.subr.bf16.mxu0 0
    %162 = vmatpush1.bf16.msra.mxu0 0
    %163 = vmatprep.subr.bf16.mxu0 0
    %164 = vmatpush1.bf16.msra.mxu0 0
    %165 = vmatprep.mubr.bf16.mxu0 0
    %166 = vmatmul.mubr.bf16.gmra.mrb[0].mxu0 %v90
    %v167 = vpop.f32.mrb[0].mxu0
    %v168 = vadd.f32 0.0, %v167
    %v169 = vpop.f32.mrb[0].mxu0
    %v170 = vadd.f32 0.0, %v169
    %v171 = vpop.f32.mrb[0].mxu0
    %v172 = vpop.f32.mrb[0].mxu0
    %173 = vdwg.mxu0
    %174 = vst [vmem:[#allocation7] sm:$0xff] %v127
    %175 = vst [vmem:[#allocation7 + $0x8] sm:$0xff] %v129
    %176 = vst [vmem:[#allocation7 + $0x10] sm:$0xff] %v168
    %177 = vst [vmem:[#allocation7 + $0x18] sm:$0xff] %v170
    // Predicated region
    $region18: #{_fused_heads.1} parent=1 // pred_check
      _
    $region19: #{_fused_heads.1} parent=1 // pred_check_branch
      %179 = sbr.rel (0) target = $region21
    $region20: #{_fused_heads.1} parent=1 // pred_region
      %s181 = ssub.s32 512, 512
      %182 = vsyncadd [#allocation4], %s181
      %s184 = sshll.u32 [#allocation7], 4
      %s185 = int_to_ptr.vmem [resolvable:$true] %s184
      %187 = dma.vmem_to_hbm [thread:$0]  %s185, 512, %s2, [#allocation4]
    $region21: #{_fused_heads.1} parent=1 // pred_fallthru
      _
    // Predicated region
    $region22: #{_fused_heads.1} parent=1 // pred_check
      _
    $region23: #{_fused_heads.1} parent=1 // pred_check_branch
      %189 = sbr.rel (0) target = $region25
    $region24: #{_fused_heads.1} parent=1 // pred_region
      %190 = dma.done [#allocation4], 512
    $region25: #{_fused_heads.1} parent=1 // pred_fallthru
      _
    %191 = vsyncpa [#allocation3], 1
    %192 = vsyncpa [#allocation6], 1
    %193 = vsyncpa [#allocation4], 1

</llo_original>
